<compile_context>
chip_gen: v6e
topology: v6e:2x2x1
jax: 0.10.0
libtpu: 0.0.40
codegen_flags: <defaults>
</compile_context>

<pallas_src>
import functools

import jax
import jax.numpy as jnp
from jax.experimental import pallas as pl
from jax.experimental.pallas import tpu as pltpu

_INV_SQRT2 = 0.7071067811865476


def _fcu_down_kernel(x_ref, w_ref, b_ref, g_ref, bt_ref, o_ref, *, eps, matmul_in_bf16):
    """One grid step: TR pooled rows (batch collapsed) -> TR*Wp patch tokens.

    x_ref : (TR, dw, Wp, dw*Cin)  feature-map rows; pool columns pre-folded onto lanes
    w_ref : (dw*Cin, Cout)        conv weight replicated over pool columns, * 1/dw^2
    b_ref, g_ref, bt_ref : (1, Cout) f32 conv bias / LN gamma / LN beta
    o_ref : (TR*Wp, Cout)         output patch tokens (lane-dense)
    """
    TR, dw, Wp, K = x_ref.shape
    T = TR * Wp

    # Row (height) pooling only; cast folded into the reduction so a bf16 input
    # never materializes a second full-size f32 copy of the tile.
    pooled = jnp.sum(x_ref[...], axis=1, dtype=jnp.float32)        # (TR, Wp, K)
    pooled = pooled.reshape(T, K)                                  # leading-dims-only reshape

    if matmul_in_bf16:
        pooled = pooled.astype(jnp.bfloat16)

    # Column pooling + 1x1 conv + 1/dw^2 scaling all live inside this single MXU
    # matmul (contraction K = dw*Cin against the pre-built weight). Bias after.
    h = jnp.dot(pooled, w_ref[...], preferred_element_type=jnp.float32)
    h = h + b_ref[...]                                             # (T, Cout)

    # LayerNorm over channels (biased variance; eps matches nn.LayerNorm(eps=1e-6)).
    mu = jnp.mean(h, axis=-1, keepdims=True)
    hc = h - mu
    var = jnp.mean(hc * hc, axis=-1, keepdims=True)
    hn = hc * jax.lax.rsqrt(var + eps)
    hn = hn * g_ref[...] + bt_ref[...]

    # Exact (erf) GELU == nn.GELU() default.
    out = 0.5 * hn * (1.0 + jax.lax.erf(hn * _INV_SQRT2))
    o_ref[...] = out.astype(o_ref.dtype)


def _pick_rows_per_tile(total_rows, wp, in_bytes_per_row, out_bytes_per_row,
                        token_target, footprint_budget):
    """Largest pooled-row tile that is (8,128)-legal for the output block,
    stays under the double-buffered VMEM budget, and (when possible) leaves
    >= 2 grid steps so both v7x TensorCores get work."""
    def fp(rows):  # double-buffered input+output tile bytes
        return 2 * rows * (in_bytes_per_row + out_bytes_per_row)

    divisors = [d for d in range(1, total_rows + 1) if total_rows % d == 0]
    # output block second-to-last dim = d*wp must be a multiple of 8, unless the
    # block covers the full array (d == total_rows).
    legal = [d for d in divisors if (d * wp) % 8 == 0 or d == total_rows]
    fitting = [d for d in legal if d * wp <= token_target and fp(d) <= footprint_budget]
    if fitting:
        multi = [d for d in fitting if total_rows // d >= 2]
        return max(multi) if multi else max(fitting)
    return min(legal)


def fcu_down_forward(x_nchw, x_t, params, *, dw_stride, eps=1e-6,
                     rows_per_tile=None, token_target=2048, matmul_in_bf16=False):
    """FCUDown forward.

    x_nchw : (B, Cin, H, W)  CNN feature map (PyTorch NCHW layout)
    x_t    : (B, L, Cout)    transformer tokens (cls token at index 0)
    params : dict with w (Cin, Cout), b / gamma / beta (Cout,) or (1, Cout)
    returns: (B, 1 + (H//dw)*(W//dw), Cout)
    """
    B, Cin, H, W = x_nchw.shape
    Cout = params["w"].shape[1]
    dw = dw_stride
    assert H % dw == 0 and W % dw == 0
    Hp, Wp = H // dw, W // dw
    P = Hp * Wp
    K = dw * Cin
    total_rows = B * Hp  # pooled rows with batch collapsed onto the row axis

    # ---- wrapper-side layout plumbing ---------------------------------------
    # One NCHW->NHWC transpose, then free contiguous reshapes:
    #   (B,Cin,H,W) -> (B,H,W,Cin) -> (B*Hp, dw, Wp, dw*Cin)
    # so the dw pool columns sit on the 128-lane / MXU-K axis.
    x = jnp.transpose(x_nchw, (0, 2, 3, 1)).reshape(total_rows, dw, Wp, K)

    # Fold pool-column replication and the 1/dw^2 average into the conv weight;
    # cast everything ONCE here (not per grid step inside the kernel).
    w_eff = jnp.tile(params["w"].astype(jnp.float32), (dw, 1)) * (1.0 / (dw * dw))
    mm_dtype = jnp.bfloat16 if matmul_in_bf16 else jnp.float32
    w_eff = w_eff.astype(mm_dtype)
    b32 = params["b"].astype(jnp.float32).reshape(1, Cout)
    g32 = params["gamma"].astype(jnp.float32).reshape(1, Cout)
    bt32 = params["beta"].astype(jnp.float32).reshape(1, Cout)

    # ---- tile selection (generation-aware: <=40 MiB double-buffered fits v7x) --
    in_bytes_per_row = dw * Wp * K * jnp.dtype(x.dtype).itemsize
    out_bytes_per_row = Wp * Cout * jnp.dtype(x_t.dtype).itemsize
    if rows_per_tile is None:
        rows_per_tile = _pick_rows_per_tile(
            total_rows, Wp, in_bytes_per_row, out_bytes_per_row,
            token_target=token_target, footprint_budget=40 * 1024 * 1024)
    assert total_rows % rows_per_tile == 0
    T = rows_per_tile * Wp
    grid = (total_rows // rows_per_tile,)

    vmem_limit = int(min(
        64 * 1024 * 1024,
        max(32 * 1024 * 1024,
            2 * rows_per_tile * (in_bytes_per_row + out_bytes_per_row)
            + 2 * K * Cout * jnp.dtype(w_eff.dtype).itemsize
            + 4 * 1024 * 1024)))

    kernel = functools.partial(_fcu_down_kernel, eps=eps, matmul_in_bf16=matmul_in_bf16)

    tokens = pl.pallas_call(
        kernel,
        out_shape=jax.ShapeDtypeStruct((total_rows * Wp, Cout), x_t.dtype),
        grid_spec=pltpu.PrefetchScalarGridSpec(
            num_scalar_prefetch=0,
            grid=grid,
            in_specs=[
                pl.BlockSpec((rows_per_tile, dw, Wp, K), lambda i: (i, 0, 0, 0)),
                pl.BlockSpec((K, Cout), lambda i: (0, 0)),
                pl.BlockSpec((1, Cout), lambda i: (0, 0)),
                pl.BlockSpec((1, Cout), lambda i: (0, 0)),
                pl.BlockSpec((1, Cout), lambda i: (0, 0)),
            ],
            out_specs=pl.BlockSpec((T, Cout), lambda i: (i, 0)),
        ),
        compiler_params=pltpu.CompilerParams(
            dimension_semantics=("parallel",),
            vmem_limit_bytes=vmem_limit),
    )(x, w_eff, b32, g32, bt32)

    tokens = tokens.reshape(B, P, Cout)
    # Prepend the raw transformer cls token (one row per batch: wrapper plumbing).
    return jnp.concatenate([x_t[:, :1, :], tokens], axis=1)


def _reference(x_nchw, x_t, params, *, dw_stride, eps=1e-6):
    """Pure-JAX reference matching PyTorch (conv -> avgpool -> LN -> GELU -> cat)."""
    B, Cin, H, W = x_nchw.shape
    Cout = params["w"].shape[1]
    x = jnp.transpose(x_nchw, (0, 2, 3, 1))
    h = jnp.einsum("bhwc,cd->bhwd", x, params["w"]) + params["b"].reshape(1, 1, 1, -1)
    Hp, Wp = H // dw_stride, W // dw_stride
    h = h.reshape(B, Hp, dw_stride, Wp, dw_stride, Cout).mean(axis=(2, 4))
    tok = h.reshape(B, Hp * Wp, Cout)
    mu = tok.mean(-1, keepdims=True)
    var = ((tok - mu) ** 2).mean(-1, keepdims=True)
    tok = (tok - mu) / jnp.sqrt(var + eps)
    tok = tok * params["gamma"].reshape(1, 1, -1) + params["beta"].reshape(1, 1, -1)
    tok = jax.nn.gelu(tok, approximate=False)
    return jnp.concatenate([x_t[:, :1, :], tok], axis=1)


if __name__ == "__main__":
    # FCUDown(inplanes=32, outplanes=128, dw_stride=4): small but lane-dense
    # (dw*Cin = 128 on the contraction axis, outplanes = 128 on the output lanes).
    B, Cin, H, W = 2, 32, 16, 16
    Cout = 128
    dw = 4
    Hp, Wp = H // dw, W // dw
    P = Hp * Wp
    L = 1 + P

    key = jax.random.PRNGKey(0)
    k = jax.random.split(key, 6)

    x = jax.random.normal(k[0], (B, Cin, H, W), jnp.float32)     # NCHW, as in PyTorch
    x_t = jax.random.normal(k[1], (B, L, Cout), jnp.float32)

    # conv_project weight (Cout, Cin, 1, 1) folded to a (Cin, Cout) matmul weight.
    w = 0.2 * jax.random.normal(k[2], (Cin, Cout), jnp.float32)
    b = 0.1 * jax.random.normal(k[3], (1, Cout), jnp.float32)
    gamma = 1.0 + 0.1 * jax.random.normal(k[4], (1, Cout), jnp.float32)
    beta = 0.1 * jax.random.normal(k[5], (1, Cout), jnp.float32)
    params = dict(w=w, b=b, gamma=gamma, beta=beta)

    # TODO(synk): on v6e/v7x pass bf16 feature maps end-to-end and set
    # matmul_in_bf16=True (halves the HBM-bound input read; needs ~1e-2 tolerances).
    out = fcu_down_forward(x, x_t, params, dw_stride=dw, matmul_in_bf16=False)
    out = jax.block_until_ready(out)

    ref = _reference(x, x_t, params, dw_stride=dw)
    assert out.shape == (B, L, Cout)
    assert jnp.allclose(out, ref, rtol=1e-3, atol=1e-3), \
        f"mismatch, max abs err = {float(jnp.max(jnp.abs(out - ref)))}"

    print("KERNEL_OK")
</pallas_src>

<mosaic_0001>
module attributes {stable_mosaic.version = 11 : i64} {
  func.func @_fcu_down_kernel(%arg0: i32, %arg1: memref<4x4x4x128xf32, #tpu.memory_space<vmem>>, %arg2: memref<128x128xf32, #tpu.memory_space<vmem>>, %arg3: memref<1x128xf32, #tpu.memory_space<vmem>>, %arg4: memref<1x128xf32, #tpu.memory_space<vmem>>, %arg5: memref<1x128xf32, #tpu.memory_space<vmem>>, %arg6: memref<16x128xf32, #tpu.memory_space<vmem>>) attributes {dimension_semantics = [#tpu.dimension_semantics<parallel>], iteration_bounds = array<i64: 2>, scalar_prefetch = 0 : i64, scratch_operands = 0 : i64, tpu.core_type = #tpu.core_type<tc>, window_params = [{transform_indices = @transform_0, window_bounds = array<i64: 4, 4, 4, 128>}, {pipeline_mode = #tpu.pipeline_mode<synchronous>, transform_indices = @transform_1, window_bounds = array<i64: 128, 128>}, {pipeline_mode = #tpu.pipeline_mode<synchronous>, transform_indices = @transform_2, window_bounds = array<i64: 1, 128>}, {pipeline_mode = #tpu.pipeline_mode<synchronous>, transform_indices = @transform_3, window_bounds = array<i64: 1, 128>}, {pipeline_mode = #tpu.pipeline_mode<synchronous>, transform_indices = @transform_4, window_bounds = array<i64: 1, 128>}, {transform_indices = @transform_5, window_bounds = array<i64: 16, 128>}]} {
    %c0 = arith.constant 0 : index
    %c0_0 = arith.constant 0 : index
    %c0_1 = arith.constant 0 : index
    %c0_2 = arith.constant 0 : index
    %0 = vector.load %arg1[%c0, %c0_0, %c0_1, %c0_2] : memref<4x4x4x128xf32, #tpu.memory_space<vmem>>, vector<4x4x4x128xf32>
    %cst = arith.constant dense<0.000000e+00> : vector<4x4x128xf32>
    %1 = vector.multi_reduction <add>, %0, %cst [1] : vector<4x4x4x128xf32> to vector<4x4x128xf32>
    %2 = vector.shape_cast %1 : vector<4x4x128xf32> to vector<16x128xf32>
    %c0_3 = arith.constant 0 : index
    %c0_4 = arith.constant 0 : index
    %3 = vector.load %arg2[%c0_3, %c0_4] : memref<128x128xf32, #tpu.memory_space<vmem>>, vector<128x128xf32>
    %cst_5 = arith.constant dense<0.000000e+00> : vector<16x128xf32>
    %4 = tpu.matmul %2, %3, %cst_5 {dimension_numbers = #tpu.dot_dimension_numbers<[1], [0], [0], [1], [0, 0, 1, 1], [], []>} : vector<16x128xf32>, vector<128x128xf32>, vector<16x128xf32> -> vector<16x128xf32>
    %c0_6 = arith.constant 0 : index
    %c0_7 = arith.constant 0 : index
    %5 = vector.load %arg3[%c0_6, %c0_7] : memref<1x128xf32, #tpu.memory_space<vmem>>, vector<1x128xf32>
    %6 = vector.broadcast %5 : vector<1x128xf32> to vector<16x128xf32>
    %7 = arith.addf %4, %6 : vector<16x128xf32>
    %cst_8 = arith.constant dense<0.000000e+00> : vector<16xf32>
    %8 = vector.multi_reduction <add>, %7, %cst_8 [1] : vector<16x128xf32> to vector<16xf32>
    %9 = vector.shape_cast %8 : vector<16xf32> to vector<16x1xf32>
    %cst_9 = arith.constant 1.280000e+02 : f32
    %10 = vector.broadcast %cst_9 : f32 to vector<16x1xf32>
    %11 = arith.divf %9, %10 : vector<16x1xf32>
    %12 = vector.broadcast %11 : vector<16x1xf32> to vector<16x128xf32>
    %13 = arith.subf %7, %12 : vector<16x128xf32>
    %14 = arith.mulf %13, %13 : vector<16x128xf32>
    %cst_10 = arith.constant dense<0.000000e+00> : vector<16xf32>
    %15 = vector.multi_reduction <add>, %14, %cst_10 [1] : vector<16x128xf32> to vector<16xf32>
    %16 = vector.shape_cast %15 : vector<16xf32> to vector<16x1xf32>
    %cst_11 = arith.constant 1.280000e+02 : f32
    %17 = vector.broadcast %cst_11 : f32 to vector<16x1xf32>
    %18 = arith.divf %16, %17 : vector<16x1xf32>
    %cst_12 = arith.constant 9.99999997E-7 : f32
    %19 = vector.broadcast %cst_12 : f32 to vector<16x1xf32>
    %20 = arith.addf %18, %19 : vector<16x1xf32>
    %21 = math.rsqrt %20 : vector<16x1xf32>
    %22 = vector.broadcast %21 : vector<16x1xf32> to vector<16x128xf32>
    %23 = arith.mulf %13, %22 : vector<16x128xf32>
    %c0_13 = arith.constant 0 : index
    %c0_14 = arith.constant 0 : index
    %24 = vector.load %arg4[%c0_13, %c0_14] : memref<1x128xf32, #tpu.memory_space<vmem>>, vector<1x128xf32>
    %25 = vector.broadcast %24 : vector<1x128xf32> to vector<16x128xf32>
    %26 = arith.mulf %23, %25 : vector<16x128xf32>
    %c0_15 = arith.constant 0 : index
    %c0_16 = arith.constant 0 : index
    %27 = vector.load %arg5[%c0_15, %c0_16] : memref<1x128xf32, #tpu.memory_space<vmem>>, vector<1x128xf32>
    %28 = vector.broadcast %27 : vector<1x128xf32> to vector<16x128xf32>
    %29 = arith.addf %26, %28 : vector<16x128xf32>
    %cst_17 = arith.constant 5.000000e-01 : f32
    %30 = vector.broadcast %cst_17 : f32 to vector<16x128xf32>
    %31 = arith.mulf %30, %29 : vector<16x128xf32>
    %cst_18 = arith.constant 0.707106769 : f32
    %32 = vector.broadcast %cst_18 : f32 to vector<16x128xf32>
    %33 = arith.mulf %29, %32 : vector<16x128xf32>
    %34 = math.erf %33 : vector<16x128xf32>
    %cst_19 = arith.constant 1.000000e+00 : f32
    %35 = vector.broadcast %cst_19 : f32 to vector<16x128xf32>
    %36 = arith.addf %35, %34 : vector<16x128xf32>
    %37 = arith.mulf %31, %36 : vector<16x128xf32>
    %c0_20 = arith.constant 0 : index
    %c0_21 = arith.constant 0 : index
    %38 = vector.load %arg6[%c0_20, %c0_21] : memref<16x128xf32, #tpu.memory_space<vmem>>, vector<16x128xf32>
    tpu.vector_store %arg6[%c0_20, %c0_21], %37 {strides = array<i32>} : memref<16x128xf32, #tpu.memory_space<vmem>>, vector<16x128xf32>,
    return
  }
  func.func @transform_0(%arg0: i32) -> (i32, i32, i32, i32) {
    %c0_i32 = arith.constant 0 : i32
    %c0_i32_0 = arith.constant 0 : i32
    %c0_i32_1 = arith.constant 0 : i32
    %c0_i32_2 = arith.constant 0 : i32
    return %arg0, %c0_i32, %c0_i32_0, %c0_i32_1 : i32, i32, i32, i32
  }
  func.func @transform_1(%arg0: i32) -> (i32, i32) {
    %c0_i32 = arith.constant 0 : i32
    %c0_i32_0 = arith.constant 0 : i32
    %c0_i32_1 = arith.constant 0 : i32
    return %c0_i32, %c0_i32_0 : i32, i32
  }
  func.func @transform_2(%arg0: i32) -> (i32, i32) {
    %c0_i32 = arith.constant 0 : i32
    %c0_i32_0 = arith.constant 0 : i32
    %c0_i32_1 = arith.constant 0 : i32
    return %c0_i32, %c0_i32_0 : i32, i32
  }
  func.func @transform_3(%arg0: i32) -> (i32, i32) {
    %c0_i32 = arith.constant 0 : i32
    %c0_i32_0 = arith.constant 0 : i32
    %c0_i32_1 = arith.constant 0 : i32
    return %c0_i32, %c0_i32_0 : i32, i32
  }
  func.func @transform_4(%arg0: i32) -> (i32, i32) {
    %c0_i32 = arith.constant 0 : i32
    %c0_i32_0 = arith.constant 0 : i32
    %c0_i32_1 = arith.constant 0 : i32
    return %c0_i32, %c0_i32_0 : i32, i32
  }
  func.func @transform_5(%arg0: i32) -> (i32, i32) {
    %c0_i32 = arith.constant 0 : i32
    %c0_i32_0 = arith.constant 0 : i32
    return %arg0, %c0_i32 : i32, i32
  }
}

</mosaic_0001>

<llo_original>
// kernel: tpu_custom_call.1
$region0: #{tpu_custom_call.1}
  #allocation0 [shape = 'u32[]', space=smem, size = 0x4, offset = 0x4, fixed_abs, tag = 'smem constant byte address 0x4 - core index']
  #allocation1 [shape = 'u32[144,128]{1,0:T(1,128)}', space=vmem, size = 0x12000, scoped, tag = 'internal scratch']
  %s0 = inlined_call_operand.hbm [shape: f32[8,4,4,128], index: 0, kind: input, shape index: {}]
  %s1 = inlined_call_operand.hbm [shape: f32[128,128], index: 1, kind: input, shape index: {}]
  %s2 = inlined_call_operand.vmem [shape: f32[1,128], index: 2, kind: input, shape index: {}]
  %s3 = inlined_call_operand.vmem [shape: f32[1,128], index: 3, kind: input, shape index: {}]
  %s4 = inlined_call_operand.vmem [shape: f32[1,128], index: 4, kind: input, shape index: {}]
  %s5 = inlined_call_operand.hbm [shape: f32[32,128], index: 5, kind: output, shape index: {}]
  %s6 = sld [smem:[#allocation0]]
  $region61: #{tpu_custom_call.1} parent=0
    _
  %s8 = ssub.s32 1, %s6
  %s9 = scalar_select 0, %s8, %s6
  $region1: #{tpu_custom_call.1} parent=0
    #allocation2 [shape = 'u8[65536]{0}', space=vmem, size = 0x10000, scoped, tag = 'input window, operand 0']
    #allocation3 [shape = 's32[2]{0}', space=sflag, size = 0x8, scoped, tag = 'scoped memory for tpu_custom_call.1']
    #allocation4 [shape = 's32[2]{0}', space=sflag, size = 0x8, scoped, tag = 'scoped memory for tpu_custom_call.1']
    #allocation5 [shape = 'u8[65536]{0}', space=vmem, size = 0x10000, scoped, tag = 'input window, operand 1, single buffered']
    #allocation6 [shape = 's32[1]{0}', space=sflag, size = 0x4, scoped, tag = 'scoped memory for tpu_custom_call.1']
    #allocation7 [shape = 'u8[16384]{0}', space=vmem, size = 0x4000, scoped, tag = 'output window, operand 0']
    %10 = vsyncpa [#allocation3], 0
    %s11 = scalar_lea.sflag [#allocation3], 1
    %12 = vsyncpa %s11, 0
    %13 = vsyncpa [#allocation6], 0
    %14 = vsyncpa [#allocation4], 0
    %s15 = scalar_lea.sflag [#allocation4], 1
    %16 = vsyncpa %s15, 0
    loop: start=0, step=1, limit=4
    $region2: #{tpu_custom_call.1} parent=1 // loop_pre_header
      _
    $region3: #{tpu_custom_call.1} parent=1 // loop_header
      %s18 = sphi 0, %s22
      %p19 = scmp.ge.s32.totalorder %s18, 4
      %s28 = sphi 0, %s30
      %s31 = sphi 0, %s28
      %s32 = sphi 0, %s31
      %s48 = sphi 0, %s32
      %s52 = sphi 0, %s52
      %s54 = sphi 0, %s52
      %s55 = sphi 0, %s54
      %s69 = sphi 0, %s55
      %s73 = sphi 0, %s73
      %s75 = sphi 0, %s73
      %s76 = sphi 0, %s75
      %s90 = sphi 0, %s76
      %s94 = sphi 0, %s94
      %s96 = sphi 0, %s94
      %s97 = sphi 0, %s96
      %s111 = sphi 0, %s97
      %s115 = sphi 0, %s115
      %s117 = sphi 0, %s115
      %s118 = sphi 0, %s117
      %s132 = sphi 0, %s118
      %s138 = sphi 0, %s140
      %s141 = sphi 0, %s138
      %s142 = sphi 0, %s141
      %s158 = sphi 0, %s142
    $region4: #{tpu_custom_call.1} parent=1 // loop_header_branch
      %21 = sbr.rel (%p19) target = $region8
    $region5: #{tpu_custom_call.1} parent=1 // loop_body
      %s23 = ssub.s32 %s18, 1
      %s24 = ssub.s32 %s18, 2
      %s25 = sadd.s32 %s18, 1
      %s26 = ssub.s32 %s18, %s25
      %p27 = scmp.eq.s32.totalorder %s26, 0
      %s29 = sadd.s32 %s28, 1
      %s30 = scalar_select %p27, %s28, %s29
      %p33 = pneg %p27
      %p34 = scmp.eq.s32.totalorder %s18, 1
      %p35 = por %p33, %p34
      %p36 = scmp.ne.s32.totalorder %s28, %s31
      %p37 = scmp.eq.s32.totalorder %s18, 0
      %p38 = por %p36, %p37
      %p39 = scmp.ne.s32.totalorder %s28, %s31
      %p40 = scmp.eq.s32.totalorder %s23, 1
      %p41 = por %p39, %p40
      %p42 = scmp.ne.s32.totalorder %s31, %s32
      %p43 = scmp.eq.s32.totalorder %s23, 0
      %p44 = por %p42, %p43
      %p45 = scmp.ne.s32.totalorder %s31, %s32
      %p46 = scmp.eq.s32.totalorder %s24, 1
      %p47 = por %p45, %p46
      %p49 = scmp.ne.s32.totalorder %s32, %s48
      %p50 = scmp.eq.s32.totalorder %s24, 0
      %p51 = por %p49, %p50
      %s53 = sadd.s32 %s52, 1
      %p56 = scmp.eq.s32.totalorder %s18, 1
      %p57 = scmp.ne.s32.totalorder %s52, %s54
      %p58 = scmp.eq.s32.totalorder %s18, 0
      %p59 = por %p57, %p58
      %p60 = scmp.ne.s32.totalorder %s52, %s54
      %p61 = scmp.eq.s32.totalorder %s23, 1
      %p62 = por %p60, %p61
      %p63 = scmp.ne.s32.totalorder %s54, %s55
      %p64 = scmp.eq.s32.totalorder %s23, 0
      %p65 = por %p63, %p64
      %p66 = scmp.ne.s32.totalorder %s54, %s55
      %p67 = scmp.eq.s32.totalorder %s24, 1
      %p68 = por %p66, %p67
      %p70 = scmp.ne.s32.totalorder %s55, %s69
      %p71 = scmp.eq.s32.totalorder %s24, 0
      %p72 = por %p70, %p71
      %s74 = sadd.s32 %s73, 1
      %p77 = scmp.eq.s32.totalorder %s18, 1
      %p78 = scmp.ne.s32.totalorder %s73, %s75
      %p79 = scmp.eq.s32.totalorder %s18, 0
      %p80 = por %p78, %p79
      %p81 = scmp.ne.s32.totalorder %s73, %s75
      %p82 = scmp.eq.s32.totalorder %s23, 1
      %p83 = por %p81, %p82
      %p84 = scmp.ne.s32.totalorder %s75, %s76
      %p85 = scmp.eq.s32.totalorder %s23, 0
      %p86 = por %p84, %p85
      %p87 = scmp.ne.s32.totalorder %s75, %s76
      %p88 = scmp.eq.s32.totalorder %s24, 1
      %p89 = por %p87, %p88
      %p91 = scmp.ne.s32.totalorder %s76, %s90
      %p92 = scmp.eq.s32.totalorder %s24, 0
      %p93 = por %p91, %p92
      %s95 = sadd.s32 %s94, 1
      %p98 = scmp.eq.s32.totalorder %s18, 1
      %p99 = scmp.ne.s32.totalorder %s94, %s96
      %p100 = scmp.eq.s32.totalorder %s18, 0
      %p101 = por %p99, %p100
      %p102 = scmp.ne.s32.totalorder %s94, %s96
      %p103 = scmp.eq.s32.totalorder %s23, 1
      %p104 = por %p102, %p103
      %p105 = scmp.ne.s32.totalorder %s96, %s97
      %p106 = scmp.eq.s32.totalorder %s23, 0
      %p107 = por %p105, %p106
      %p108 = scmp.ne.s32.totalorder %s96, %s97
      %p109 = scmp.eq.s32.totalorder %s24, 1
      %p110 = por %p108, %p109
      %p112 = scmp.ne.s32.totalorder %s97, %s111
      %p113 = scmp.eq.s32.totalorder %s24, 0
      %p114 = por %p112, %p113
      %s116 = sadd.s32 %s115, 1
      %p119 = scmp.eq.s32.totalorder %s18, 1
      %p120 = scmp.ne.s32.totalorder %s115, %s117
      %p121 = scmp.eq.s32.totalorder %s18, 0
      %p122 = por %p120, %p121
      %p123 = scmp.ne.s32.totalorder %s115, %s117
      %p124 = scmp.eq.s32.totalorder %s23, 1
      %p125 = por %p123, %p124
      %p126 = scmp.ne.s32.totalorder %s117, %s118
      %p127 = scmp.eq.s32.totalorder %s23, 0
      %p128 = por %p126, %p127
      %p129 = scmp.ne.s32.totalorder %s117, %s118
      %p130 = scmp.eq.s32.totalorder %s24, 1
      %p131 = por %p129, %p130
      %p133 = scmp.ne.s32.totalorder %s118, %s132
      %p134 = scmp.eq.s32.totalorder %s24, 0
      %p135 = por %p133, %p134
      %s136 = ssub.s32 %s18, %s25
      %p137 = scmp.eq.s32.totalorder %s136, 0
      %s139 = sadd.s32 %s138, 1
      %s140 = scalar_select %p137, %s138, %s139
      %p143 = pneg %p137
      %p144 = scmp.eq.s32.totalorder %s18, 1
      %p145 = por %p143, %p144
      %p146 = scmp.ne.s32.totalorder %s138, %s141
      %p147 = scmp.eq.s32.totalorder %s18, 0
      %p148 = por %p146, %p147
      %p149 = scmp.ne.s32.totalorder %s138, %s141
      %p150 = scmp.eq.s32.totalorder %s23, 1
      %p151 = por %p149, %p150
      %p152 = scmp.ne.s32.totalorder %s141, %s142
      %p153 = scmp.eq.s32.totalorder %s23, 0
      %p154 = por %p152, %p153
      %p155 = scmp.ne.s32.totalorder %s141, %s142
      %p156 = scmp.eq.s32.totalorder %s24, 1
      %p157 = por %p155, %p156
      %p159 = scmp.ne.s32.totalorder %s142, %s158
      %p160 = scmp.eq.s32.totalorder %s24, 0
      %p161 = por %p159, %p160
      %p162 = scmp.le.s32.totalorder 1, %s18
      %p163 = scmp.lt.s32.totalorder %s18, 3
      %p164 = pnand %p162, %p163
      %p165 = pneg %p164
      // Predicated region
      $region9: #{tpu_custom_call.1} parent=5 // pred_check
        _
      $region10: #{tpu_custom_call.1} parent=5 // pred_check_branch
        %167 = sbr.rel (%p164) target = $region12
      $region11: #{tpu_custom_call.1} parent=5 // pred_region
        %s168 = ssub.s32 %s18, 1
        // Predicated region
        $region13: #{tpu_custom_call.1} parent=11 // pred_check
          %p169 = pneg %p65
        $region14: #{tpu_custom_call.1} parent=11 // pred_check_branch
          %171 = sbr.rel (%p169) target = $region16
        $region15: #{tpu_custom_call.1} parent=11 // pred_region
          %s173 = ssub.s32 2048, 2048
          %174 = vsyncadd [#allocation6], %s173
          %s175 = sshll.u32 [#allocation5], 4
          %s176 = int_to_ptr.vmem [resolvable:$true] %s175
          %181 = dma.hbm_to_vmem [thread:$0]  %s1, 2048, %s176, [#allocation6], 128, 128, 8
        $region16: #{tpu_custom_call.1} parent=11 // pred_fallthru
          _
        // Predicated region
        $region17: #{tpu_custom_call.1} parent=11 // pred_check
          %p182 = pneg %p86
        $region18: #{tpu_custom_call.1} parent=11 // pred_check_branch
          %184 = sbr.rel (%p182) target = $region20
        $region19: #{tpu_custom_call.1} parent=11 // pred_region
          _
        $region20: #{tpu_custom_call.1} parent=11 // pred_fallthru
          _
        // Predicated region
        $region21: #{tpu_custom_call.1} parent=11 // pred_check
          %p185 = pneg %p107
        $region22: #{tpu_custom_call.1} parent=11 // pred_check_branch
          %187 = sbr.rel (%p185) target = $region24
        $region23: #{tpu_custom_call.1} parent=11 // pred_region
          _
        $region24: #{tpu_custom_call.1} parent=11 // pred_fallthru
          _
        // Predicated region
        $region25: #{tpu_custom_call.1} parent=11 // pred_check
          %p188 = pneg %p128
        $region26: #{tpu_custom_call.1} parent=11 // pred_check_branch
          %190 = sbr.rel (%p188) target = $region28
        $region27: #{tpu_custom_call.1} parent=11 // pred_region
          _
        $region28: #{tpu_custom_call.1} parent=11 // pred_fallthru
          _
      $region12: #{tpu_custom_call.1} parent=5 // pred_fallthru
        _
      %p191 = scmp.lt.s32.totalorder %s18, 2
      // Predicated region
      $region29: #{tpu_custom_call.1} parent=5 // pred_check
        %p192 = pneg %p191
      $region30: #{tpu_custom_call.1} parent=5 // pred_check_branch
        %194 = sbr.rel (%p192) target = $region32
      $region31: #{tpu_custom_call.1} parent=5 // pred_region
        // Predicated region
        $region33: #{tpu_custom_call.1} parent=31 // pred_check
          %p195 = pneg %p38
        $region34: #{tpu_custom_call.1} parent=31 // pred_check_branch
          %197 = sbr.rel (%p195) target = $region36
        $region35: #{tpu_custom_call.1} parent=31 // pred_region
          %s198 = sand.u32 %s28, 1
          %s199 = scalar_lea.sflag [#allocation3], %s198
          %s200 = sand.u32 %s28, 1
          %s201 = smul.addr %s200, 64
          %s202 = scalar_lea.vmem [#allocation2], %s201
          %s203 = smul.u32 4, %s18
          %s205 = ssub.s32 1024, 1024
          %206 = vsyncadd %s199, %s205
          %s207 = smul.addr %s203, 4
          %s208 = smul.addr %s207, 64
          %s209 = scalar_lea.hbm %s0, %s208
          %s210 = sshll.u32 %s202, 4
          %s211 = int_to_ptr.vmem [resolvable:$true] %s210
          %216 = dma.hbm_to_vmem [thread:$0]  %s209, 1024, %s211, %s199, 64, 64, 4
        $region36: #{tpu_custom_call.1} parent=31 // pred_fallthru
          _
      $region32: #{tpu_custom_call.1} parent=5 // pred_fallthru
        _
      %p217 = scmp.le.s32.totalorder 1, %s18
      %p218 = scmp.lt.s32.totalorder %s18, 3
      %p219 = pnand %p217, %p218
      %p220 = pneg %p219
      // Predicated region
      $region37: #{tpu_custom_call.1} parent=5 // pred_check
        _
      $region38: #{tpu_custom_call.1} parent=5 // pred_check_branch
        %222 = sbr.rel (%p219) target = $region40
      $region39: #{tpu_custom_call.1} parent=5 // pred_region
        %s223 = ssub.s32 %s18, 1
        %s224 = sand.u32 %s31, 1
        %s225 = scalar_lea.sflag [#allocation3], %s224
        %s226 = sand.u32 %s31, 1
        %s227 = smul.addr %s226, 64
        %s228 = scalar_lea.vmem [#allocation2], %s227
        // Predicated region
        $region41: #{tpu_custom_call.1} parent=39 // pred_check
          %p229 = pneg %p44
        $region42: #{tpu_custom_call.1} parent=39 // pred_check_branch
          %231 = sbr.rel (%p229) target = $region44
        $region43: #{tpu_custom_call.1} parent=39 // pred_region
          %232 = dma.done %s225, 1024
        $region44: #{tpu_custom_call.1} parent=39 // pred_fallthru
          _
        // Predicated region
        $region45: #{tpu_custom_call.1} parent=39 // pred_check
          %p233 = pneg %p65
        $region46: #{tpu_custom_call.1} parent=39 // pred_check_branch
          %235 = sbr.rel (%p233) target = $region48
        $region47: #{tpu_custom_call.1} parent=39 // pred_region
          %236 = dma.done [#allocation6], 2048
        $region48: #{tpu_custom_call.1} parent=39 // pred_fallthru
          _
        %s237 = sand.u32 %s31, 1
        %s238 = scalar_lea.sflag [#allocation3], %s237
        %s239 = sand.u32 %s31, 1
        %s240 = smul.addr %s239, 64
        %s241 = scalar_lea.vmem [#allocation2], %s240
        %p242 = pneg %p44
        %p243 = pneg %p41
        %p244 = pneg %p65
        %p245 = pneg %p62
        %p246 = pneg %p86
        %p247 = pneg %p83
        %p248 = pneg %p107
        %p249 = pneg %p104
        %p250 = pneg %p128
        %p251 = pneg %p125
        %p252 = pneg %p154
        %p253 = pneg %p151
        %s254 = sand.u32 %s141, 1
        %s255 = scalar_lea.sflag [#allocation4], %s254
        %s256 = sand.u32 %s141, 1
        %s257 = smul.addr %s256, 16
        %s258 = scalar_lea.vmem [#allocation7], %s257
        %s259 = smul.u32 4, %s23
        %s260 = smul.u32 2, %s23
        %v261 = vld [vmem:[%s228] sm:$0xf]
        %v262 = vld [vmem:[%s228 + $0x4] sm:$0xf]
        %v263 = vld [vmem:[%s228 + $0x8] sm:$0xf]
        %v264 = vld [vmem:[%s228 + $0xc] sm:$0xf]
        %v265 = vld [vmem:[%s228 + $0x10] sm:$0xf]
        %v266 = vld [vmem:[%s228 + $0x14] sm:$0xf]
        %v267 = vld [vmem:[%s228 + $0x18] sm:$0xf]
        %v268 = vld [vmem:[%s228 + $0x1c] sm:$0xf]
        %v269 = vld [vmem:[%s228 + $0x20] sm:$0xf]
        %v270 = vld [vmem:[%s228 + $0x24] sm:$0xf]
        %v271 = vld [vmem:[%s228 + $0x28] sm:$0xf]
        %v272 = vld [vmem:[%s228 + $0x2c] sm:$0xf]
        %v273 = vld [vmem:[%s228 + $0x30] sm:$0xf]
        %v274 = vld [vmem:[%s228 + $0x34] sm:$0xf]
        %v275 = vld [vmem:[%s228 + $0x38] sm:$0xf]
        %v276 = vld [vmem:[%s228 + $0x3c] sm:$0xf]
        %vm277 = vcmask 1043456
        %v278 = vsel %vm277, %v261, 0.0
        %v279 = vsel %vm277, %v262, 0.0
        %v280 = vadd.f32 %v278, %v279
        %v281 = vsel %vm277, %v263, 0.0
        %v282 = vadd.f32 %v280, %v281
        %v283 = vsel %vm277, %v264, 0.0
        %v284 = vadd.f32 %v282, %v283
        %v285 = vsel %vm277, %v265, 0.0
        %v286 = vsel %vm277, %v266, 0.0
        %v287 = vadd.f32 %v285, %v286
        %v288 = vsel %vm277, %v267, 0.0
        %v289 = vadd.f32 %v287, %v288
        %v290 = vsel %vm277, %v268, 0.0
        %v291 = vadd.f32 %v289, %v290
        %v292 = vsel %vm277, %v269, 0.0
        %v293 = vsel %vm277, %v270, 0.0
        %v294 = vadd.f32 %v292, %v293
        %v295 = vsel %vm277, %v271, 0.0
        %v296 = vadd.f32 %v294, %v295
        %v297 = vsel %vm277, %v272, 0.0
        %v298 = vadd.f32 %v296, %v297
        %v299 = vsel %vm277, %v273, 0.0
        %v300 = vsel %vm277, %v274, 0.0
        %v301 = vadd.f32 %v299, %v300
        %v302 = vsel %vm277, %v275, 0.0
        %v303 = vadd.f32 %v301, %v302
        %v304 = vsel %vm277, %v276, 0.0
        %v305 = vadd.f32 %v303, %v304
        %v306 = vld [vmem:[#allocation5] sm:$0xff]
        %v307 = vld [vmem:[#allocation5 + $0x8] sm:$0xff]
        %v308 = vld [vmem:[#allocation5 + $0x10] sm:$0xff]
        %v309 = vld [vmem:[#allocation5 + $0x18] sm:$0xff]
        %v310 = vld [vmem:[#allocation5 + $0x20] sm:$0xff]
        %v311 = vld [vmem:[#allocation5 + $0x28] sm:$0xff]
        %v312 = vld [vmem:[#allocation5 + $0x30] sm:$0xff]
        %v313 = vld [vmem:[#allocation5 + $0x38] sm:$0xff]
        %v314 = vld [vmem:[#allocation5 + $0x40] sm:$0xff]
        %v315 = vld [vmem:[#allocation5 + $0x48] sm:$0xff]
        %v316 = vld [vmem:[#allocation5 + $0x50] sm:$0xff]
        %v317 = vld [vmem:[#allocation5 + $0x58] sm:$0xff]
        %v318 = vld [vmem:[#allocation5 + $0x60] sm:$0xff]
        %v319 = vld [vmem:[#allocation5 + $0x68] sm:$0xff]
        %v320 = vld [vmem:[#allocation5 + $0x70] sm:$0xff]
        %v321 = vld [vmem:[#allocation5 + $0x78] sm:$0xff]
        %v322 = vld [vmem:[%s2] sm:$0x1]
        %v324 = vlaneseq
        %v325 = vshrl.u32 %v324, 7
        %v326 = vsub.s32 0, %v325
        %v327 = vrot.slane %v322, %v326
        %v333 = vcombine.low %v284, %v291
        %v334 = vcombine.low %v298, %v305
        %337 = vmatprep.subr.mxu0 0.0
        %338 = vmatpush1.msra.mxu0 %v321
        %339 = vmatprep.subr.mxu0 0.0
        %340 = vmatpush1.msra.mxu0 %v320
        %341 = vmatprep.subr.mxu0 0.0
        %342 = vmatpush1.msra.mxu0 %v319
        %343 = vmatprep.subr.mxu0 0.0
        %344 = vmatpush1.msra.mxu0 %v318
        %345 = vmatprep.subr.mxu0 0.0
        %346 = vmatpush1.msra.mxu0 %v317
        %347 = vmatprep.subr.mxu0 0.0
        %348 = vmatpush1.msra.mxu0 %v316
        %349 = vmatprep.subr.mxu0 0.0
        %350 = vmatpush1.msra.mxu0 %v315
        %351 = vmatprep.subr.mxu0 0.0
        %352 = vmatpush1.msra.mxu0 %v314
        %353 = vmatprep.subr.mxu0 0.0
        %354 = vmatpush1.msra.mxu0 %v313
        %355 = vmatprep.subr.mxu0 0.0
        %356 = vmatpush1.msra.mxu0 %v312
        %357 = vmatprep.subr.mxu0 0.0
        %358 = vmatpush1.msra.mxu0 %v311
        %359 = vmatprep.subr.mxu0 0.0
        %360 = vmatpush1.msra.mxu0 %v310
        %361 = vmatprep.subr.mxu0 0.0
        %362 = vmatpush1.msra.mxu0 %v309
        %363 = vmatprep.subr.mxu0 0.0
        %364 = vmatpush1.msra.mxu0 %v308
        %365 = vmatprep.subr.mxu0 0.0
        %366 = vmatpush1.msra.mxu0 %v307
        %367 = vmatprep.subr.mxu0 0.0
        %368 = vmatpush1.msra.mxu0 %v306
        %369 = vmatprep.subr.mxu0 0.0
        %370 = vmatpush2.msra.mxu0 0.0
        %371 = vmatprep.subr.mxu0 0.0
        %372 = vmatpush2.msra.mxu0 0.0
        %373 = vmatprep.subr.mxu0 0.0
        %374 = vmatpush2.msra.mxu0 0.0
        %375 = vmatprep.subr.mxu0 0.0
        %376 = vmatpush2.msra.mxu0 0.0
        %377 = vmatprep.subr.mxu0 0.0
        %378 = vmatpush2.msra.mxu0 0.0
        %379 = vmatprep.subr.mxu0 0.0
        %380 = vmatpush2.msra.mxu0 0.0
        %381 = vmatprep.subr.mxu0 0.0
        %382 = vmatpush2.msra.mxu0 0.0
        %383 = vmatprep.subr.mxu0 0.0
        %384 = vmatpush2.msra.mxu0 0.0
        %385 = vmatprep.subr.mxu0 0.0
        %386 = vmatpush2.msra.mxu0 0.0
        %387 = vmatprep.subr.mxu0 0.0
        %388 = vmatpush2.msra.mxu0 0.0
        %389 = vmatprep.subr.mxu0 0.0
        %390 = vmatpush2.msra.mxu0 0.0
        %391 = vmatprep.subr.mxu0 0.0
        %392 = vmatpush2.msra.mxu0 0.0
        %393 = vmatprep.subr.mxu0 0.0
        %394 = vmatpush2.msra.mxu0 0.0
        %395 = vmatprep.subr.mxu0 0.0
        %396 = vmatpush2.msra.mxu0 0.0
        %397 = vmatprep.subr.mxu0 0.0
        %398 = vmatpush2.msra.mxu0 0.0
        %399 = vmatprep.subr.mxu0 0.0
        %400 = vmatpush2.msra.mxu0 0.0
        %401 = vmatprep.mubr.f32.mxu0 0.0
        %402 = vmatmul.mubr.f32.gmra.mxu0 %v333
        %v403 = vpop.f32.mrf.mxu0
        %v404 = vadd.f32 %v327, %v403
        %v405 = vpop.f32.mrf.mxu0
        %406 = vmatprep.mubr.f32.mxu0 0.0
        %407 = vmatmul.mubr.f32.gmra.mxu0 %v334
        %v408 = vpop.f32.mrf.mxu0
        %v409 = vadd.f32 %v327, %v408
        %v410 = vpop.f32.mrf.mxu0
        %411 = vdwg.mxu0
        %412 = vadd.xlane.f32.xlu0 %v404
        %v413 = vpop.xlane.xlu0 %412
        %414 = vadd.xlane.f32.xlu0 %v409
        %v415 = vpop.xlane.xlu0 %414
        %v416 = vrcp.pop 128.0
        %v417 = vmul.f32 %v413, %v416
        %v418 = vmul.f32 %v415, %v416
        %v419 = vsub.f32 %v404, %v417
        %v420 = vsub.f32 %v409, %v418
        %v421 = vmul.f32 %v419, %v419
        %v422 = vmul.f32 %v420, %v420
        %423 = vadd.xlane.f32.xlu0 %v421
        %v424 = vpop.xlane.xlu0 %423
        %425 = vadd.xlane.f32.xlu0 %v422
        %v426 = vpop.xlane.xlu0 %425
        %v427 = vmul.f32 %v424, %v416
        %v428 = vmul.f32 %v426, %v416
        %v429 = vadd.f32 %v427, 1e-06
        %v430 = vadd.f32 %v428, 1e-06
        %v431 = vrsqrt.pop %v429
        %v432 = vrsqrt.pop %v430
        %v433 = vmul.f32 %v419, %v431
        %v434 = vmul.f32 %v420, %v432
        %v435 = vld [vmem:[%s3] sm:$0x1]
        %v437 = vlaneseq
        %v438 = vshrl.u32 %v437, 7
        %v439 = vsub.s32 0, %v438
        %v440 = vrot.slane %v435, %v439
        %v442 = vmul.f32 %v433, %v440
        %v443 = vmul.f32 %v434, %v440
        %v444 = vld [vmem:[%s4] sm:$0x1]
        %v446 = vlaneseq
        %v447 = vshrl.u32 %v446, 7
        %v448 = vsub.s32 0, %v447
        %v449 = vrot.slane %v444, %v448
        %v451 = vadd.f32 %v442, %v449
        %v452 = vadd.f32 %v443, %v449
        %v453 = vmul.f32 %v451, 0.5
        %v454 = vmul.f32 %v452, 0.5
        %v455 = vmul.f32 %v451, 0.70710677
        %v456 = vmul.f32 %v452, 0.70710677
        %v457 = verf.f32.pop %v455
        %v458 = verf.f32.pop %v456
        %v459 = vadd.f32 %v457, 1.0
        %v460 = vadd.f32 %v458, 1.0
        %v461 = vmul.f32 %v453, %v459
        %v462 = vmul.f32 %v454, %v460
        %463 = vst [vmem:[%s258] sm:$0xff] %v461
        %464 = vst [vmem:[%s258 + $0x8] sm:$0xff] %v462
        %s465 = sand.u32 %s141, 1
        %s466 = scalar_lea.sflag [#allocation4], %s465
        %s467 = sand.u32 %s141, 1
        %s468 = smul.addr %s467, 16
        %s469 = scalar_lea.vmem [#allocation7], %s468
        // Predicated region
        $region49: #{tpu_custom_call.1} parent=39 // pred_check
          %p470 = pneg %p151
        $region50: #{tpu_custom_call.1} parent=39 // pred_check_branch
          %472 = sbr.rel (%p470) target = $region52
        $region51: #{tpu_custom_call.1} parent=39 // pred_region
          %s473 = smul.u32 2, %s23
          %s475 = ssub.s32 256, 256
          %476 = vsyncadd %s466, %s475
          %s477 = smul.addr %s473, 128
          %s478 = scalar_lea.hbm %s5, %s477
          %s479 = sshll.u32 %s469, 4
          %s480 = int_to_ptr.vmem [resolvable:$true] %s479
          %485 = dma.vmem_to_hbm [thread:$0]  %s480, 256, %s478, %s466, 128, 128, 8
        $region52: #{tpu_custom_call.1} parent=39 // pred_fallthru
          _
      $region40: #{tpu_custom_call.1} parent=5 // pred_fallthru
        _
      %p486 = scmp.le.s32.totalorder 2, %s18
      // Predicated region
      $region53: #{tpu_custom_call.1} parent=5 // pred_check
        %p487 = pneg %p486
      $region54: #{tpu_custom_call.1} parent=5 // pred_check_branch
        %489 = sbr.rel (%p487) target = $region56
      $region55: #{tpu_custom_call.1} parent=5 // pred_region
        %s490 = ssub.s32 %s18, 2
        // Predicated region
        $region57: #{tpu_custom_call.1} parent=55 // pred_check
          %p491 = pneg %p157
        $region58: #{tpu_custom_call.1} parent=55 // pred_check_branch
          %493 = sbr.rel (%p491) target = $region60
        $region59: #{tpu_custom_call.1} parent=55 // pred_region
          %s494 = sand.u32 %s142, 1
          %s495 = scalar_lea.sflag [#allocation4], %s494
          %s496 = sand.u32 %s142, 1
          %s497 = smul.addr %s496, 16
          %s498 = scalar_lea.vmem [#allocation7], %s497
          %499 = dma.done %s495, 256
        $region60: #{tpu_custom_call.1} parent=55 // pred_fallthru
          _
      $region56: #{tpu_custom_call.1} parent=5 // pred_fallthru
        _
    $region6: #{tpu_custom_call.1} parent=1 // loop_footer
      %s22 = sadd.s32 1, %s18
    $region7: #{tpu_custom_call.1} parent=1 // loop_footer_branch
      %17 = sbr.rel target = $region3
    $region8: #{tpu_custom_call.1} parent=1 // loop_exit
      _
    %500 = vsyncpa [#allocation3], 1
    %s501 = scalar_lea.sflag [#allocation3], 1
    %502 = vsyncpa %s501, 1
    %503 = vsyncpa [#allocation6], 1
    %504 = vsyncpa [#allocation4], 1
    %s505 = scalar_lea.sflag [#allocation4], 1
    %506 = vsyncpa %s505, 1

</llo_original>
